<compile_context>
chip_gen: v7x
topology: tpu7x:2x2x1
jax: 0.10.0
libtpu: 0.0.40
codegen_flags: <defaults>
</compile_context>

<pallas_src>
import functools

import jax
import jax.numpy as jnp
from jax.experimental import pallas as pl
from jax.experimental.pallas import tpu as pltpu


def _round_up(x, m):
    return ((x + m - 1) // m) * m


def _ce_kernel(pred_ref, depth_ref, out_ref, *, n_total, num_layers, tile_n):
    """One grid step over `tile_n` pixels, class-major layout.

    pred_ref:  [L, tile_n] logits (native dtype) -- classes on sublanes, pixels on lanes
    depth_ref: [1, tile_n] depths
    out_ref:   [1, 128]    lane-dense partial sum of per-pixel losses for this tile
    """
    i = pl.program_id(0)

    # Tail mask: pixel columns past the true pixel count contribute 0.
    col = jax.lax.broadcasted_iota(jnp.int32, (1, tile_n), 1) + i * tile_n
    valid = col < n_total                                             # [1, TN] bool

    # Mask immediately after load so OOB garbage from a partial last tile can't poison math.
    x = jnp.where(valid, pred_ref[...].astype(jnp.float32), 0.0)      # [L, TN]
    d = jnp.where(valid, depth_ref[...].astype(jnp.float32), 0.0)     # [1, TN]

    # Fused target generation (synthesized generate_layers): depth bin per pixel -> one-hot.
    # NOTE: the one-hot gather shortcut below relies on targets being one-hot; if the real
    # generate_layers produced soft targets, the general sum(target * log_softmax) path applies.
    bins = jnp.clip(jnp.floor(d * num_layers), 0.0, num_layers - 1).astype(jnp.int32)  # [1, TN]
    cls = jax.lax.broadcasted_iota(jnp.int32, (num_layers, tile_n), 0)                 # [L, TN]
    sel = cls == bins                                                                   # [L, TN]

    # Numerically-stable one-hot cross entropy: loss = logsumexp(x) - x[bin]  (lane-dense).
    m = jnp.max(x, axis=0, keepdims=True)                             # [1, TN]  sublane reduce
    e = jnp.exp(x - m)                                                # [L, TN]  dense EUP
    s = jnp.sum(e, axis=0, keepdims=True)                             # [1, TN]  (>= 1, no log(0))
    picked = jnp.sum(jnp.where(sel, x, 0.0), axis=0, keepdims=True)   # [1, TN]
    loss_pix = jnp.where(valid, m + jnp.log(s) - picked, 0.0)         # [1, TN]

    # Reduce to a lane-dense (1, 128) partial with pure VPU adds (no per-step cross-lane reduce).
    partial = loss_pix[:, 0:128]
    for k in range(1, tile_n // 128):
        partial = partial + loss_pix[:, k * 128:(k + 1) * 128]
    out_ref[...] = partial


def cross_entropy_depth_bins(pred_t, depths_row, *, num_layers, tile_n):
    """pred_t: [L, N] logits (class-major). depths_row: [1, N]. Returns scalar mean CE (f32)."""
    l, n = pred_t.shape
    tile = min(_round_up(tile_n, 128), _round_up(n, 128))
    grid_n = pl.cdiv(n, tile)

    partials = pl.pallas_call(
        functools.partial(_ce_kernel, n_total=n, num_layers=num_layers, tile_n=tile),
        out_shape=jax.ShapeDtypeStruct((grid_n, 128), jnp.float32),
        grid_spec=pltpu.PrefetchScalarGridSpec(
            num_scalar_prefetch=0,
            grid=(grid_n,),
            in_specs=[
                pl.BlockSpec((l, tile), lambda i: (0, i)),   # logits, class-major
                pl.BlockSpec((1, tile), lambda i: (0, i)),   # depths
            ],
            out_specs=pl.BlockSpec((1, 128), lambda i: (i, 0)),
        ),
        compiler_params=pltpu.CompilerParams(
            dimension_semantics=("parallel",),               # independent tiles -> megacore OK
            vmem_limit_bytes=32 * 1024 * 1024,
        ),
    )(pred_t, depths_row)
    return jnp.sum(partials) / jnp.float32(n)


def generate_layers(seg13, depths, num_layers):
    """Reference-path stand-in for the external `generate_layers` (undefined in the spec).

    Bins depth values in [0, 1) into `num_layers` equal-width bins; returns a list of
    num_layers binary masks shaped like `depths` (NCHW, C=1).
    """
    # TODO(synk): original generate_layers is external to the module; synthesized as depth
    # binning (seg13 unused). The Pallas kernel fuses this exact computation.
    bins = jnp.clip(jnp.floor(depths * num_layers).astype(jnp.int32), 0, num_layers - 1)
    return [(bins == l).astype(jnp.float32) for l in range(num_layers)]


def supervised_loss(predictions, data, *, tile_n=32768):
    """predictions: [B, H, W, L] logits (layer dim last). data = (seg13, depths), both [B,1,H,W]."""
    seg13, depths = data  # seg13 unused by the synthesized generate_layers
    del seg13
    b, h, w, l = predictions.shape
    n = b * h * w
    # Layout plumbing only (no compute hoisted): class-major [L, N] puts the class axis on
    # sublanes and pixels on lanes so the kernel is fully lane-dense. Depths stay as a flat
    # [1, N] row in the same pixel order as predictions.reshape(N, L).
    pred_t = jnp.transpose(predictions.reshape(n, l), (1, 0))
    depths_row = depths.reshape(1, n)
    return cross_entropy_depth_bins(pred_t, depths_row, num_layers=l, tile_n=tile_n)


def _reference_loss(predictions, layers):
    logp = jax.nn.log_softmax(predictions.astype(jnp.float32), axis=-1)
    return jnp.mean(-jnp.sum(layers * logp, axis=-1))


if __name__ == "__main__":
    key = jax.random.PRNGKey(0)
    k1, k2, k3 = jax.random.split(key, 3)

    B, H, W, L = 2, 16, 16, 8

    predictions = jax.random.normal(k1, (B, H, W, L), dtype=jnp.float32)
    depths = jax.random.uniform(k2, (B, 1, H, W), dtype=jnp.float32)          # depths in [0,1)
    seg13 = jax.random.randint(k3, (B, 1, H, W), 0, 13).astype(jnp.float32)    # segmentation ids

    loss_fn = jax.jit(supervised_loss)
    loss = loss_fn(predictions, (seg13, depths))
    loss = jax.block_until_ready(loss)

    # silent correctness check against a pure-JAX reference
    layers_ref = jnp.squeeze(jnp.stack(generate_layers(seg13, depths, L), axis=-1), axis=1)
    ref = jax.block_until_ready(_reference_loss(predictions, layers_ref))
    assert jnp.allclose(loss, ref, rtol=1e-5, atol=1e-5), (loss, ref)

    print("KERNEL_OK")
</pallas_src>

<mosaic_0001>
module attributes {stable_mosaic.version = 11 : i64} {
  func.func @_ce_kernel(%arg0: i32, %arg1: memref<8x512xf32, #tpu.memory_space<vmem>>, %arg2: memref<1x512xf32, #tpu.memory_space<vmem>>, %arg3: memref<1x128xf32, #tpu.memory_space<vmem>>) attributes {dimension_semantics = [#tpu.dimension_semantics<parallel>], iteration_bounds = array<i64: 1>, scalar_prefetch = 0 : i64, scratch_operands = 0 : i64, tpu.core_type = #tpu.core_type<tc>, window_params = [{transform_indices = @transform_0, window_bounds = array<i64: 8, 512>}, {transform_indices = @transform_1, window_bounds = array<i64: 1, 512>}, {transform_indices = @transform_2, window_bounds = array<i64: 1, 128>}]} {
    %0 = tpu.iota {dimensions = array<i32: 1>} : vector<1x512xi32>
    %c512_i32 = arith.constant 512 : i32
    %1 = arith.muli %arg0, %c512_i32 : i32
    %2 = vector.broadcast %1 : i32 to vector<1x512xi32>
    %3 = arith.addi %0, %2 : vector<1x512xi32>
    %c512_i32_0 = arith.constant 512 : i32
    %4 = vector.broadcast %c512_i32_0 : i32 to vector<1x512xi32>
    %5 = arith.cmpi slt, %3, %4 : vector<1x512xi32>
    %c0 = arith.constant 0 : index
    %c0_1 = arith.constant 0 : index
    %6 = vector.load %arg1[%c0, %c0_1] : memref<8x512xf32, #tpu.memory_space<vmem>>, vector<8x512xf32>
    %cst = arith.constant 0.000000e+00 : f32
    %7 = vector.shape_cast %5 : vector<1x512xi1> to vector<1x512xi1>
    %8 = vector.broadcast %7 : vector<1x512xi1> to vector<8x512xi1>
    %9 = vector.broadcast %cst : f32 to vector<8x512xf32>
    %10 = arith.select %8, %6, %9 : vector<8x512xi1>, vector<8x512xf32>
    %c0_2 = arith.constant 0 : index
    %c0_3 = arith.constant 0 : index
    %11 = vector.load %arg2[%c0_2, %c0_3] : memref<1x512xf32, #tpu.memory_space<vmem>>, vector<1x512xf32>
    %cst_4 = arith.constant 0.000000e+00 : f32
    %12 = vector.broadcast %cst_4 : f32 to vector<1x512xf32>
    %13 = arith.select %5, %11, %12 : vector<1x512xi1>, vector<1x512xf32>
    %cst_5 = arith.constant 8.000000e+00 : f32
    %14 = vector.broadcast %cst_5 : f32 to vector<1x512xf32>
    %15 = arith.mulf %13, %14 : vector<1x512xf32>
    %16 = math.floor %15 : vector<1x512xf32>
    %cst_6 = arith.constant 0.000000e+00 : f32
    %c7_i32 = arith.constant 7 : i32
    %17 = vector.broadcast %cst_6 : f32 to vector<1x512xf32>
    %18 = arith.maximumf %17, %16 : vector<1x512xf32>
    %19 = arith.sitofp %c7_i32 : i32 to f32
    %20 = vector.broadcast %19 : f32 to vector<1x512xf32>
    %21 = arith.minimumf %20, %18 : vector<1x512xf32>
    %22 = arith.fptosi %21 : vector<1x512xf32> to vector<1x512xi32>
    %23 = tpu.iota {dimensions = array<i32: 0>} : vector<8x512xi32>
    %24 = vector.broadcast %22 : vector<1x512xi32> to vector<8x512xi32>
    %25 = arith.cmpi eq, %23, %24 : vector<8x512xi32>
    %cst_7 = arith.constant dense<0xFF800000> : vector<512xf32>
    %26 = vector.multi_reduction <maximumf>, %10, %cst_7 [0] : vector<8x512xf32> to vector<512xf32>
    %27 = vector.shape_cast %26 : vector<512xf32> to vector<1x512xf32>
    %28 = vector.broadcast %27 : vector<1x512xf32> to vector<8x512xf32>
    %29 = arith.subf %10, %28 : vector<8x512xf32>
    %30 = math.exp %29 : vector<8x512xf32>
    %cst_8 = arith.constant dense<0.000000e+00> : vector<512xf32>
    %31 = vector.multi_reduction <add>, %30, %cst_8 [0] : vector<8x512xf32> to vector<512xf32>
    %32 = vector.shape_cast %31 : vector<512xf32> to vector<1x512xf32>
    %cst_9 = arith.constant 0.000000e+00 : f32
    %33 = vector.broadcast %cst_9 : f32 to vector<8x512xf32>
    %34 = arith.select %25, %10, %33 : vector<8x512xi1>, vector<8x512xf32>
    %cst_10 = arith.constant dense<0.000000e+00> : vector<512xf32>
    %35 = vector.multi_reduction <add>, %34, %cst_10 [0] : vector<8x512xf32> to vector<512xf32>
    %36 = vector.shape_cast %35 : vector<512xf32> to vector<1x512xf32>
    %37 = math.log %32 : vector<1x512xf32>
    %38 = arith.addf %27, %37 : vector<1x512xf32>
    %39 = arith.subf %38, %36 : vector<1x512xf32>
    %cst_11 = arith.constant 0.000000e+00 : f32
    %40 = vector.broadcast %cst_11 : f32 to vector<1x512xf32>
    %41 = arith.select %5, %39, %40 : vector<1x512xi1>, vector<1x512xf32>
    %42 = vector.extract_strided_slice %41 {offsets = [0, 0], sizes = [1, 128], strides = [1, 1]} : vector<1x512xf32> to vector<1x128xf32>
    %43 = vector.extract_strided_slice %41 {offsets = [0, 128], sizes = [1, 128], strides = [1, 1]} : vector<1x512xf32> to vector<1x128xf32>
    %44 = arith.addf %42, %43 : vector<1x128xf32>
    %45 = vector.extract_strided_slice %41 {offsets = [0, 256], sizes = [1, 128], strides = [1, 1]} : vector<1x512xf32> to vector<1x128xf32>
    %46 = arith.addf %44, %45 : vector<1x128xf32>
    %47 = vector.extract_strided_slice %41 {offsets = [0, 384], sizes = [1, 128], strides = [1, 1]} : vector<1x512xf32> to vector<1x128xf32>
    %48 = arith.addf %46, %47 : vector<1x128xf32>
    %c0_12 = arith.constant 0 : index
    %c0_13 = arith.constant 0 : index
    %49 = vector.load %arg3[%c0_12, %c0_13] : memref<1x128xf32, #tpu.memory_space<vmem>>, vector<1x128xf32>
    tpu.vector_store %arg3[%c0_12, %c0_13], %48 {strides = array<i32>} : memref<1x128xf32, #tpu.memory_space<vmem>>, vector<1x128xf32>,
    return
  }
  func.func @transform_0(%arg0: i32) -> (i32, i32) {
    %c0_i32 = arith.constant 0 : i32
    %c0_i32_0 = arith.constant 0 : i32
    return %c0_i32, %arg0 : i32, i32
  }
  func.func @transform_1(%arg0: i32) -> (i32, i32) {
    %c0_i32 = arith.constant 0 : i32
    %c0_i32_0 = arith.constant 0 : i32
    return %c0_i32, %arg0 : i32, i32
  }
  func.func @transform_2(%arg0: i32) -> (i32, i32) {
    %c0_i32 = arith.constant 0 : i32
    %c0_i32_0 = arith.constant 0 : i32
    return %arg0, %c0_i32 : i32, i32
  }
}

</mosaic_0001>

<llo_original>
// kernel: supervised_loss.1
$region0: #{supervised_loss.1}
  #allocation0 [shape = 'u32[]', space=smem, size = 0x4, offset = 0x4, fixed_abs, tag = 'smem constant byte address 0x4 - core index']
  #allocation1 [shape = 'u32[144,128]{1,0:T(1,128)}', space=vmem, size = 0x12000, scoped, tag = 'internal scratch']
  %s0 = inlined_call_operand.vmem [shape: f32[8,512], index: 0, kind: input, shape index: {}]
  %s1 = inlined_call_operand.vmem [shape: f32[1,512], index: 1, kind: input, shape index: {}]
  %s2 = inlined_call_operand.vmem [shape: f32[1,128], index: 2, kind: output, shape index: {}]
  %s3 = sld [smem:[#allocation0]]
  $region18: #{supervised_loss.1} parent=0
    _
  %s5 = ssub.s32 1, %s3
  %s6 = scalar_select 0, %s5, %s3
  // Predicated region
  $region2: #{supervised_loss.1} parent=0 // pred_check
    _
  $region3: #{supervised_loss.1} parent=0 // pred_check_branch
    %8 = sbr.rel (0) target = $region5
  $region4: #{supervised_loss.1} parent=0 // pred_region
    _
  $region5: #{supervised_loss.1} parent=0 // pred_fallthru
    _
  // Predicated region
  $region6: #{supervised_loss.1} parent=0 // pred_check
    _
  $region7: #{supervised_loss.1} parent=0 // pred_check_branch
    %10 = sbr.rel (0) target = $region9
  $region8: #{supervised_loss.1} parent=0 // pred_region
    _
  $region9: #{supervised_loss.1} parent=0 // pred_fallthru
    _
  %v11 = vlaneseq
  %v12 = vand.u32 %v11, 127
  %v13 = vadd.s32 %v12, 128
  %v14 = vadd.s32 %v12, 256
  %v15 = vadd.s32 %v12, 384
  %s16 = smul.u32 0, 512
  %v17 = vstv %s16
  %v18 = vadd.s32 %v12, %v17
  %v19 = vadd.s32 %v13, %v17
  %v20 = vadd.s32 %v14, %v17
  %v21 = vadd.s32 %v15, %v17
  %vm22 = vcmp.lt.s32.totalorder %v18, 512
  %vm23 = vcmp.lt.s32.totalorder %v19, 512
  %vm24 = vcmp.lt.s32.totalorder %v20, 512
  %vm25 = vcmp.lt.s32.totalorder %v21, 512
  %v26 = vld [vmem:[%s0] sm:$0xff]
  %v27 = vld [vmem:[%s0 + $0x8] sm:$0xff]
  %v28 = vld [vmem:[%s0 + $0x10] sm:$0xff]
  %v29 = vld [vmem:[%s0 + $0x18] sm:$0xff]
  %v30 = vsel %vm22, 1, 0
  %v31 = vsel %vm23, 1, 0
  %v32 = vsel %vm24, 1, 0
  %v33 = vsel %vm25, 1, 0
  %vm34 = vcmp.eq.s32.totalorder %v30, 1
  %vm35 = vcmp.eq.s32.totalorder %v31, 1
  %vm36 = vcmp.eq.s32.totalorder %v32, 1
  %vm37 = vcmp.eq.s32.totalorder %v33, 1
  %v38 = vsel %vm34, %v26, 0.0
  %v39 = vsel %vm35, %v27, 0.0
  %v40 = vsel %vm36, %v28, 0.0
  %v41 = vsel %vm37, %v29, 0.0
  %v42 = vld [vmem:[%s1] sm:$0xf]
  %v44 = vlaneseq
  %v45 = vshrl.u32 %v44, 7
  %v46 = vsub.s32 0, %v45
  %v47 = vrot.slane %v42, %v46
  %v48 = vlaneseq
  %v49 = vshrl.u32 %v48, 7
  %v50 = vsub.s32 1, %v49
  %v51 = vrot.slane %v42, %v50
  %v52 = vlaneseq
  %v53 = vshrl.u32 %v52, 7
  %v54 = vsub.s32 2, %v53
  %v55 = vrot.slane %v42, %v54
  %v56 = vlaneseq
  %v57 = vshrl.u32 %v56, 7
  %v58 = vsub.s32 3, %v57
  %v59 = vrot.slane %v42, %v58
  %v64 = vsel %vm22, %v47, 0.0
  %v65 = vsel %vm23, %v51, 0.0
  %v66 = vsel %vm24, %v55, 0.0
  %v67 = vsel %vm25, %v59, 0.0
  %v68 = vmul.f32 %v64, 8.0
  %v69 = vmul.f32 %v65, 8.0
  %v70 = vmul.f32 %v66, 8.0
  %v71 = vmul.f32 %v67, 8.0
  %v72 = vfloor.f32 %v68
  %v73 = vfloor.f32 %v69
  %v74 = vfloor.f32 %v70
  %v75 = vfloor.f32 %v71
  %v76 = vmax.f32 %v72, 0.0
  %v77 = vmax.f32 %v73, 0.0
  %v78 = vmax.f32 %v74, 0.0
  %v79 = vmax.f32 %v75, 0.0
  %v80 = vmin.f32 %v76, 7.0
  %v81 = vmin.f32 %v77, 7.0
  %v82 = vmin.f32 %v78, 7.0
  %v83 = vmin.f32 %v79, 7.0
  %v84 = vcvt.f32.s32.to.zero.pseudo %v80
  %v85 = vcvt.f32.s32.to.zero.pseudo %v81
  %v86 = vcvt.f32.s32.to.zero.pseudo %v82
  %v87 = vcvt.f32.s32.to.zero.pseudo %v83
  %v88 = vlaneseq
  %v89 = vshrl.u32 %v88, 7
  %v90 = vlaneseq
  %v91 = vshrl.u32 %v90, 7
  %v92 = vsub.s32 0, %v91
  %v93 = vrot.slane %v84, %v92
  %v94 = vlaneseq
  %v95 = vshrl.u32 %v94, 7
  %v96 = vsub.s32 0, %v95
  %v97 = vrot.slane %v85, %v96
  %v98 = vlaneseq
  %v99 = vshrl.u32 %v98, 7
  %v100 = vsub.s32 0, %v99
  %v101 = vrot.slane %v86, %v100
  %v102 = vlaneseq
  %v103 = vshrl.u32 %v102, 7
  %v104 = vsub.s32 0, %v103
  %v105 = vrot.slane %v87, %v104
  %vm106 = vcmp.eq.s32.totalorder %v89, %v93
  %vm107 = vcmp.eq.s32.totalorder %v89, %v97
  %vm108 = vcmp.eq.s32.totalorder %v89, %v101
  %vm109 = vcmp.eq.s32.totalorder %v89, %v105
  %v110 = vrot.slane %v38, 4
  %v111 = vmax.f32 %v38, %v110
  %v112 = vrot.slane %v111, 2
  %v113 = vmax.f32 %v111, %v112
  %v114 = vrot.slane %v113, 1
  %v115 = vmax.f32 %v113, %v114
  %v116 = vrot.slane %v39, 4
  %v117 = vmax.f32 %v39, %v116
  %v118 = vrot.slane %v117, 2
  %v119 = vmax.f32 %v117, %v118
  %v120 = vrot.slane %v119, 1
  %v121 = vmax.f32 %v119, %v120
  %v122 = vrot.slane %v40, 4
  %v123 = vmax.f32 %v40, %v122
  %v124 = vrot.slane %v123, 2
  %v125 = vmax.f32 %v123, %v124
  %v126 = vrot.slane %v125, 1
  %v127 = vmax.f32 %v125, %v126
  %v128 = vrot.slane %v41, 4
  %v129 = vmax.f32 %v41, %v128
  %v130 = vrot.slane %v129, 2
  %v131 = vmax.f32 %v129, %v130
  %v132 = vrot.slane %v131, 1
  %v133 = vmax.f32 %v131, %v132
  %v134 = vsub.f32 %v38, %v115
  %v135 = vsub.f32 %v39, %v121
  %v136 = vsub.f32 %v40, %v127
  %v137 = vsub.f32 %v41, %v133
  %v138 = vmul.f32 %v134, 1.442695
  %v139 = vpow.pop %v138
  %v140 = vmul.f32 %v135, 1.442695
  %v141 = vpow.pop %v140
  %v142 = vmul.f32 %v136, 1.442695
  %v143 = vpow.pop %v142
  %v144 = vmul.f32 %v137, 1.442695
  %v145 = vpow.pop %v144
  %v146 = vrot.slane %v139, 4
  %v147 = vadd.f32 %v139, %v146
  %v148 = vrot.slane %v147, 2
  %v149 = vadd.f32 %v147, %v148
  %v150 = vrot.slane %v149, 1
  %v151 = vadd.f32 %v149, %v150
  %v152 = vrot.slane %v141, 4
  %v153 = vadd.f32 %v141, %v152
  %v154 = vrot.slane %v153, 2
  %v155 = vadd.f32 %v153, %v154
  %v156 = vrot.slane %v155, 1
  %v157 = vadd.f32 %v155, %v156
  %v158 = vrot.slane %v143, 4
  %v159 = vadd.f32 %v143, %v158
  %v160 = vrot.slane %v159, 2
  %v161 = vadd.f32 %v159, %v160
  %v162 = vrot.slane %v161, 1
  %v163 = vadd.f32 %v161, %v162
  %v164 = vrot.slane %v145, 4
  %v165 = vadd.f32 %v145, %v164
  %v166 = vrot.slane %v165, 2
  %v167 = vadd.f32 %v165, %v166
  %v168 = vrot.slane %v167, 1
  %v169 = vadd.f32 %v167, %v168
  %v170 = vsel %vm106, %v38, 0.0
  %v171 = vsel %vm107, %v39, 0.0
  %v172 = vsel %vm108, %v40, 0.0
  %v173 = vsel %vm109, %v41, 0.0
  %v174 = vrot.slane %v170, 4
  %v175 = vadd.f32 %v170, %v174
  %v176 = vrot.slane %v175, 2
  %v177 = vadd.f32 %v175, %v176
  %v178 = vrot.slane %v177, 1
  %v179 = vadd.f32 %v177, %v178
  %v180 = vrot.slane %v171, 4
  %v181 = vadd.f32 %v171, %v180
  %v182 = vrot.slane %v181, 2
  %v183 = vadd.f32 %v181, %v182
  %v184 = vrot.slane %v183, 1
  %v185 = vadd.f32 %v183, %v184
  %v186 = vrot.slane %v172, 4
  %v187 = vadd.f32 %v172, %v186
  %v188 = vrot.slane %v187, 2
  %v189 = vadd.f32 %v187, %v188
  %v190 = vrot.slane %v189, 1
  %v191 = vadd.f32 %v189, %v190
  %v192 = vrot.slane %v173, 4
  %v193 = vadd.f32 %v173, %v192
  %v194 = vrot.slane %v193, 2
  %v195 = vadd.f32 %v193, %v194
  %v196 = vrot.slane %v195, 1
  %v197 = vadd.f32 %v195, %v196
  %v198 = vlog2.pop %v151
  %v199 = vmul.f32 %v198, 0.6931472
  %v200 = vlog2.pop %v157
  %v201 = vmul.f32 %v200, 0.6931472
  %v202 = vlog2.pop %v163
  %v203 = vmul.f32 %v202, 0.6931472
  %v204 = vlog2.pop %v169
  %v205 = vmul.f32 %v204, 0.6931472
  %v206 = vadd.f32 %v115, %v199
  %v207 = vadd.f32 %v121, %v201
  %v208 = vadd.f32 %v127, %v203
  %v209 = vadd.f32 %v133, %v205
  %v210 = vsub.f32 %v206, %v179
  %v211 = vsub.f32 %v207, %v185
  %v212 = vsub.f32 %v208, %v191
  %v213 = vsub.f32 %v209, %v197
  %v214 = vsel %vm22, %v210, 0.0
  %v215 = vsel %vm23, %v211, 0.0
  %v216 = vsel %vm24, %v212, 0.0
  %v217 = vsel %vm25, %v213, 0.0
  %v218 = vadd.f32 %v214, %v215
  %v219 = vadd.f32 %v218, %v216
  %v220 = vadd.f32 %v219, %v217
  %221 = vst [vmem:[%s2] sm:$0x1] %v220
  // Predicated region
  $region10: #{supervised_loss.1} parent=0 // pred_check
    _
  $region11: #{supervised_loss.1} parent=0 // pred_check_branch
    %223 = sbr.rel (0) target = $region13
  $region12: #{supervised_loss.1} parent=0 // pred_region
    _
  $region13: #{supervised_loss.1} parent=0 // pred_fallthru
    _
  // Predicated region
  $region14: #{supervised_loss.1} parent=0 // pred_check
    _
  $region15: #{supervised_loss.1} parent=0 // pred_check_branch
    %225 = sbr.rel (0) target = $region17
  $region16: #{supervised_loss.1} parent=0 // pred_region
    _
  $region17: #{supervised_loss.1} parent=0 // pred_fallthru
    _

</llo_original>
